<compile_context>
chip_gen: v7x
topology: tpu7x:2x2x1
jax: 0.10.0
libtpu: 0.0.40
codegen_flags: <defaults>
</compile_context>

<pallas_src>
import functools

import jax
import jax.numpy as jnp
from jax.experimental import pallas as pl
from jax.experimental.pallas import tpu as pltpu

LANE = 128      # lane width
SUB = 8         # f32 sublane height (one vreg is (8, 128) f32)
TM_MAX = 4096   # rows per grid step (4096 x 128 f32 = 2 MiB per input block)
N_CORES = 2     # leading "parallel" grid axis (v7x megacore; harmless on 1-TC)


def _focal_loss_kernel(gamma, n_valid, block_elems, steps_per_core, last_full,
                       needs_mask, binary_labels, logits_ref, labels_ref,
                       out_w_ref, out_l_ref):
    c = pl.program_id(0)            # core-split index
    j = pl.program_id(1)            # row-block index within this core

    @pl.when(j == 0)
    def _():
        out_w_ref[...] = jnp.zeros_like(out_w_ref)
        out_l_ref[...] = jnp.zeros_like(out_l_ref)

    x = logits_ref[...].astype(jnp.float32)
    y = labels_ref[...].astype(jnp.float32)

    # Shared stable terms: e = exp(-|x|), sp = log(1 + exp(-|x|)).
    e = jnp.exp(-jnp.abs(x))
    sp = jnp.log1p(e)
    # Numerically stable BCE-with-logits (identical to torch's formulation).
    bce = jnp.maximum(x, 0.0) - x * y + sp

    if gamma == 0.0:
        weighted = bce
    elif binary_labels and float(gamma).is_integer() and 1.0 <= gamma <= 4.0:
        # Binary labels: modulator = [exp(-y*x) * sigmoid(x)]**gamma, where
        #   exp(-y*x)*sigmoid(x) = e/(1+e) if (y-0.5)*x >= 0 else 1/(1+e).
        # Reuses e -> no second exp (one less heavy EUP op per element).
        num = jnp.where((y - 0.5) * x >= 0.0, e, 1.0)
        s = num / (1.0 + e)
        mod = s
        for _ in range(int(gamma) - 1):
            mod = mod * s
        weighted = mod * bce
    else:
        # log(1+exp(-x)) == max(-x,0) + log1p(exp(-|x|))   (stable rewrite).
        modulator = jnp.exp(-gamma * (y * x + jnp.maximum(-x, 0.0) + sp))
        weighted = modulator * bce

    tm = x.shape[0]

    def _accumulate(w, yv):
        # Fold (tm, LANE) -> (tm//SUB, SUB, LANE) and sum the leading axis:
        # pure vreg-wise VPU adds into the vreg-shaped resident output block.
        out_w_ref[...] += jnp.sum(w.reshape(tm // SUB, SUB, LANE), axis=0)
        out_l_ref[...] += jnp.sum(yv.reshape(tm // SUB, SUB, LANE), axis=0)

    if not needs_mask:
        _accumulate(weighted, y)
    else:
        blk = c * steps_per_core + j          # global (unclamped) block id

        @pl.when(blk < last_full)
        def _():
            _accumulate(weighted, y)

        @pl.when(blk >= last_full)
        def _():
            # Ragged / virtual blocks: mask by the global flat element index.
            # thresh <= 0 for virtual (clamped duplicate) blocks -> zero
            # contribution.  Select-based where keeps any garbage (NaN/Inf)
            # from the out-of-range region out of BOTH accumulators.
            thresh = n_valid - blk * block_elems
            ridx = jax.lax.broadcasted_iota(jnp.int32, (tm, LANE), 0)
            cidx = jax.lax.broadcasted_iota(jnp.int32, (tm, LANE), 1)
            valid = (ridx * LANE + cidx) < thresh
            _accumulate(jnp.where(valid, weighted, 0.0),
                        jnp.where(valid, y, 0.0))


def _sublane_multiple(dtype):
    # Min second-to-last tile dim on TPU: f32 -> 8, bf16 -> 16, int8/bool -> 32.
    return max(SUB, 32 // jnp.dtype(dtype).itemsize)


def focal_loss(logits, labels, *, alpha, gamma):
    """Pallas TPU focal loss forward.  Returns a scalar f32."""
    n = logits.size
    assert labels.size == n
    assert n > 0

    # Keep logits in their native float dtype (cast happens in-kernel).
    if not jnp.issubdtype(logits.dtype, jnp.floating):
        logits = logits.astype(jnp.float32)
    # bool / integer labels travel as int8 instead of f32 (~37% fewer bytes).
    labels_binary = not jnp.issubdtype(labels.dtype, jnp.floating)
    if labels_binary:
        labels = labels.astype(jnp.int8)

    lg = logits.reshape(-1)
    lb = labels.reshape(-1)

    # Pad only to one (sub_mult x 128) row unit so the (rows, 128) reshape and
    # every block shape are legal for the dtypes involved; nicely sized inputs
    # are zero-copy.
    sub_mult = max(_sublane_multiple(lg.dtype), _sublane_multiple(lb.dtype))
    pad_unit = sub_mult * LANE
    n_padded = ((n + pad_unit - 1) // pad_unit) * pad_unit
    pad = n_padded - n
    if pad:
        lg = jnp.pad(lg, (0, pad))
        lb = jnp.pad(lb, (0, pad))
    rows = n_padded // LANE
    lg = lg.reshape(rows, LANE)
    lb = lb.reshape(rows, LANE)

    rows_block = min(TM_MAX, rows)        # == rows, or a multiple of 32
    block_elems = rows_block * LANE
    assert n < 2**31 - 4 * block_elems, "flat index would overflow int32"

    real_blocks = -(-rows // rows_block)
    steps = -(-real_blocks // N_CORES)                 # row blocks per core
    last_full = real_blocks if n % block_elems == 0 else real_blocks - 1
    needs_mask = (n % block_elems != 0) or (N_CORES * steps != real_blocks)

    def in_idx(c, j):
        # Clamp virtual (over-allocated) blocks onto the last real block: the
        # repeated index lets the pipeline skip the DMA, and the kernel masks
        # their contribution to zero.
        return (jnp.minimum(c * steps + j, real_blocks - 1), 0)

    def out_idx(c, j):
        return (c, 0)

    kernel = functools.partial(
        _focal_loss_kernel, float(gamma), int(n), int(block_elems), int(steps),
        int(last_full), bool(needs_mask), bool(labels_binary))

    # VMEM budget: double-buffered input blocks + headroom for the f32
    # elementwise temporaries Mosaic materializes over one block.
    in_block_bytes = block_elems * (lg.dtype.itemsize + lb.dtype.itemsize)
    f32_block_bytes = block_elems * 4
    vmem_limit = min(56 << 20,
                     max(32 << 20,
                         2 * in_block_bytes + 14 * f32_block_bytes + (2 << 20)))

    sum_w, sum_l = pl.pallas_call(
        kernel,
        out_shape=(jax.ShapeDtypeStruct((N_CORES * SUB, LANE), jnp.float32),
                   jax.ShapeDtypeStruct((N_CORES * SUB, LANE), jnp.float32)),
        grid=(N_CORES, steps),
        in_specs=[
            pl.BlockSpec((rows_block, LANE), in_idx),
            pl.BlockSpec((rows_block, LANE), in_idx),
        ],
        out_specs=(
            pl.BlockSpec((SUB, LANE), out_idx),
            pl.BlockSpec((SUB, LANE), out_idx),
        ),
        compiler_params=pltpu.CompilerParams(
            dimension_semantics=("parallel", "arbitrary"),
            vmem_limit_bytes=int(vmem_limit)),
    )(lg, lb)

    # Tiny final combine (alpha fold + cross-lane reduce + divide) in XLA.
    # Note: sum(labels) == 0 yields inf/NaN exactly like the PyTorch module.
    return jnp.float32(alpha) * jnp.sum(sum_w) / jnp.sum(sum_l)


def _focal_loss_ref(logits, labels, *, alpha, gamma):
    """Pure-JAX reference matching the PyTorch module."""
    x = logits.astype(jnp.float32)
    y = labels.astype(jnp.float32)
    bce = jnp.maximum(x, 0.0) - x * y + jnp.log1p(jnp.exp(-jnp.abs(x)))
    if gamma == 0:
        mod = 1.0
    else:
        mod = jnp.exp(-gamma * y * x - gamma * jnp.log(1.0 + jnp.exp(-x)))
    return jnp.sum(alpha * mod * bce) / jnp.sum(y)


if __name__ == "__main__":
    key = jax.random.PRNGKey(0)
    k1, k2, k3, k4 = jax.random.split(key, 4)

    alpha, gamma = 0.25, 2.0

    # Case 1: NCHW f32 logits / f32 {0,1} labels (module spec; generic path,
    # no padding, exercises the 2-way core split + virtual-block masking).
    logits = jax.random.normal(k1, (2, 4, 16, 16), dtype=jnp.float32)
    labels = jax.random.bernoulli(k2, 0.5, (2, 4, 16, 16)).astype(jnp.float32)
    fl = jax.block_until_ready(focal_loss(logits, labels, alpha=alpha, gamma=gamma))
    ref = _focal_loss_ref(logits, labels, alpha=alpha, gamma=gamma)
    assert jnp.allclose(fl, ref, rtol=1e-4, atol=1e-6), (fl, ref)

    # Case 2: ragged element count + bool labels (int8 label path, masked
    # partial block, gamma==2 binary fast path).
    logits2 = jax.random.normal(k3, (2, 3, 17, 19), dtype=jnp.float32)
    labels2 = jax.random.bernoulli(k4, 0.5, (2, 3, 17, 19))
    fl2 = jax.block_until_ready(focal_loss(logits2, labels2, alpha=alpha, gamma=gamma))
    ref2 = _focal_loss_ref(logits2, labels2, alpha=alpha, gamma=gamma)
    assert jnp.allclose(fl2, ref2, rtol=1e-4, atol=1e-6), (fl2, ref2)

    # Case 3: gamma == 0 (pure alpha-weighted BCE path).
    fl3 = jax.block_until_ready(focal_loss(logits, labels, alpha=alpha, gamma=0.0))
    ref3 = _focal_loss_ref(logits, labels, alpha=alpha, gamma=0.0)
    assert jnp.allclose(fl3, ref3, rtol=1e-4, atol=1e-6), (fl3, ref3)

    print("KERNEL_OK")
</pallas_src>

<mosaic_0001>
module attributes {stable_mosaic.version = 11 : i64} {
  func.func @_focal_loss_kernel(%arg0: i32, %arg1: i32, %arg2: memref<16x128xf32, #tpu.memory_space<vmem>>, %arg3: memref<16x128xf32, #tpu.memory_space<vmem>>, %arg4: memref<8x128xf32, #tpu.memory_space<vmem>>, %arg5: memref<8x128xf32, #tpu.memory_space<vmem>>) attributes {dimension_semantics = [#tpu.dimension_semantics<parallel>, #tpu.dimension_semantics<arbitrary>], iteration_bounds = array<i64: 2, 1>, scalar_prefetch = 0 : i64, scratch_operands = 0 : i64, tpu.core_type = #tpu.core_type<tc>, window_params = [{transform_indices = @transform_0, window_bounds = array<i64: 16, 128>}, {transform_indices = @transform_1, window_bounds = array<i64: 16, 128>}, {transform_indices = @transform_2, window_bounds = array<i64: 8, 128>}, {transform_indices = @transform_3, window_bounds = array<i64: 8, 128>}]} {
    %c0_i32 = arith.constant 0 : i32
    %0 = arith.cmpi eq, %arg1, %c0_i32 : i32
    %1 = arith.extui %0 : i1 to i32
    %c0_i32_0 = arith.constant 0 : i32
    %2 = arith.cmpi ne, %1, %c0_i32_0 : i32
    scf.if %2 {
      %cst_12 = arith.constant 0.000000e+00 : f32
      %34 = vector.broadcast %cst_12 : f32 to vector<8x128xf32>
      %c0_13 = arith.constant 0 : index
      %c0_14 = arith.constant 0 : index
      %35 = vector.load %arg4[%c0_13, %c0_14] : memref<8x128xf32, #tpu.memory_space<vmem>>, vector<8x128xf32>
      tpu.vector_store %arg4[%c0_13, %c0_14], %34 {strides = array<i32>} : memref<8x128xf32, #tpu.memory_space<vmem>>, vector<8x128xf32>,
      %cst_15 = arith.constant 0.000000e+00 : f32
      %36 = vector.broadcast %cst_15 : f32 to vector<8x128xf32>
      %c0_16 = arith.constant 0 : index
      %c0_17 = arith.constant 0 : index
      %37 = vector.load %arg5[%c0_16, %c0_17] : memref<8x128xf32, #tpu.memory_space<vmem>>, vector<8x128xf32>
      tpu.vector_store %arg5[%c0_16, %c0_17], %36 {strides = array<i32>} : memref<8x128xf32, #tpu.memory_space<vmem>>, vector<8x128xf32>,
    } else {
    }
    %c0 = arith.constant 0 : index
    %c0_1 = arith.constant 0 : index
    %3 = vector.load %arg2[%c0, %c0_1] : memref<16x128xf32, #tpu.memory_space<vmem>>, vector<16x128xf32>
    %c0_2 = arith.constant 0 : index
    %c0_3 = arith.constant 0 : index
    %4 = vector.load %arg3[%c0_2, %c0_3] : memref<16x128xf32, #tpu.memory_space<vmem>>, vector<16x128xf32>
    %5 = math.absf %3 : vector<16x128xf32>
    %cst = arith.constant 0.000000e+00 : f32
    %6 = vector.broadcast %cst : f32 to vector<16x128xf32>
    %7 = arith.subf %6, %5 : vector<16x128xf32>
    %8 = math.exp %7 : vector<16x128xf32>
    %9 = math.log1p %8 : vector<16x128xf32>
    %cst_4 = arith.constant 0.000000e+00 : f32
    %10 = vector.broadcast %cst_4 : f32 to vector<16x128xf32>
    %11 = arith.maximumf %3, %10 : vector<16x128xf32>
    %12 = arith.mulf %3, %4 : vector<16x128xf32>
    %13 = arith.subf %11, %12 : vector<16x128xf32>
    %14 = arith.addf %13, %9 : vector<16x128xf32>
    %15 = arith.mulf %4, %3 : vector<16x128xf32>
    %cst_5 = arith.constant 0.000000e+00 : f32
    %16 = vector.broadcast %cst_5 : f32 to vector<16x128xf32>
    %17 = arith.subf %16, %3 : vector<16x128xf32>
    %cst_6 = arith.constant 0.000000e+00 : f32
    %18 = vector.broadcast %cst_6 : f32 to vector<16x128xf32>
    %19 = arith.maximumf %17, %18 : vector<16x128xf32>
    %20 = arith.addf %15, %19 : vector<16x128xf32>
    %21 = arith.addf %20, %9 : vector<16x128xf32>
    %cst_7 = arith.constant -2.000000e+00 : f32
    %22 = vector.broadcast %cst_7 : f32 to vector<16x128xf32>
    %23 = arith.mulf %22, %21 : vector<16x128xf32>
    %24 = math.exp %23 : vector<16x128xf32>
    %25 = arith.mulf %24, %14 : vector<16x128xf32>
    %c1_i32 = arith.constant 1 : i32
    %26 = arith.muli %arg0, %c1_i32 : i32
    %27 = arith.addi %26, %arg1 : i32
    %c1_i32_8 = arith.constant 1 : i32
    %28 = arith.cmpi slt, %27, %c1_i32_8 : i32
    %29 = arith.extui %28 : i1 to i32
    %c0_i32_9 = arith.constant 0 : i32
    %30 = arith.cmpi ne, %29, %c0_i32_9 : i32
    scf.if %30 {
      %c0_12 = arith.constant 0 : index
      %c0_13 = arith.constant 0 : index
      %34 = vector.load %arg4[%c0_12, %c0_13] : memref<8x128xf32, #tpu.memory_space<vmem>>, vector<8x128xf32>
      %35 = vector.shape_cast %25 : vector<16x128xf32> to vector<2x8x128xf32>
      %cst_14 = arith.constant dense<0.000000e+00> : vector<8x128xf32>
      %36 = vector.multi_reduction <add>, %35, %cst_14 [0] : vector<2x8x128xf32> to vector<8x128xf32>
      %37 = arith.addf %34, %36 : vector<8x128xf32>
      %c0_15 = arith.constant 0 : index
      %c0_16 = arith.constant 0 : index
      %38 = vector.load %arg4[%c0_15, %c0_16] : memref<8x128xf32, #tpu.memory_space<vmem>>, vector<8x128xf32>
      tpu.vector_store %arg4[%c0_15, %c0_16], %37 {strides = array<i32>} : memref<8x128xf32, #tpu.memory_space<vmem>>, vector<8x128xf32>,
      %c0_17 = arith.constant 0 : index
      %c0_18 = arith.constant 0 : index
      %39 = vector.load %arg5[%c0_17, %c0_18] : memref<8x128xf32, #tpu.memory_space<vmem>>, vector<8x128xf32>
      %40 = vector.shape_cast %4 : vector<16x128xf32> to vector<2x8x128xf32>
      %cst_19 = arith.constant dense<0.000000e+00> : vector<8x128xf32>
      %41 = vector.multi_reduction <add>, %40, %cst_19 [0] : vector<2x8x128xf32> to vector<8x128xf32>
      %42 = arith.addf %39, %41 : vector<8x128xf32>
      %c0_20 = arith.constant 0 : index
      %c0_21 = arith.constant 0 : index
      %43 = vector.load %arg5[%c0_20, %c0_21] : memref<8x128xf32, #tpu.memory_space<vmem>>, vector<8x128xf32>
      tpu.vector_store %arg5[%c0_20, %c0_21], %42 {strides = array<i32>} : memref<8x128xf32, #tpu.memory_space<vmem>>, vector<8x128xf32>,
    } else {
    }
    %c1_i32_10 = arith.constant 1 : i32
    %31 = arith.cmpi sge, %27, %c1_i32_10 : i32
    %32 = arith.extui %31 : i1 to i32
    %c0_i32_11 = arith.constant 0 : i32
    %33 = arith.cmpi ne, %32, %c0_i32_11 : i32
    scf.if %33 {
      %c2048_i32 = arith.constant 2048 : i32
      %34 = arith.muli %27, %c2048_i32 : i32
      %c2048_i32_12 = arith.constant 2048 : i32
      %35 = arith.subi %c2048_i32_12, %34 : i32
      %36 = tpu.iota {dimensions = array<i32: 0>} : vector<16x128xi32>
      %37 = tpu.iota {dimensions = array<i32: 1>} : vector<16x128xi32>
      %c128_i32 = arith.constant 128 : i32
      %38 = vector.broadcast %c128_i32 : i32 to vector<16x128xi32>
      %39 = arith.muli %36, %38 : vector<16x128xi32>
      %40 = arith.addi %39, %37 : vector<16x128xi32>
      %41 = vector.broadcast %35 : i32 to vector<16x128xi32>
      %42 = arith.cmpi slt, %40, %41 : vector<16x128xi32>
      %cst_13 = arith.constant 0.000000e+00 : f32
      %43 = vector.broadcast %cst_13 : f32 to vector<16x128xf32>
      %44 = arith.select %42, %25, %43 : vector<16x128xi1>, vector<16x128xf32>
      %cst_14 = arith.constant 0.000000e+00 : f32
      %45 = vector.broadcast %cst_14 : f32 to vector<16x128xf32>
      %46 = arith.select %42, %4, %45 : vector<16x128xi1>, vector<16x128xf32>
      %c0_15 = arith.constant 0 : index
      %c0_16 = arith.constant 0 : index
      %47 = vector.load %arg4[%c0_15, %c0_16] : memref<8x128xf32, #tpu.memory_space<vmem>>, vector<8x128xf32>
      %48 = vector.shape_cast %44 : vector<16x128xf32> to vector<2x8x128xf32>
      %cst_17 = arith.constant dense<0.000000e+00> : vector<8x128xf32>
      %49 = vector.multi_reduction <add>, %48, %cst_17 [0] : vector<2x8x128xf32> to vector<8x128xf32>
      %50 = arith.addf %47, %49 : vector<8x128xf32>
      %c0_18 = arith.constant 0 : index
      %c0_19 = arith.constant 0 : index
      %51 = vector.load %arg4[%c0_18, %c0_19] : memref<8x128xf32, #tpu.memory_space<vmem>>, vector<8x128xf32>
      tpu.vector_store %arg4[%c0_18, %c0_19], %50 {strides = array<i32>} : memref<8x128xf32, #tpu.memory_space<vmem>>, vector<8x128xf32>,
      %c0_20 = arith.constant 0 : index
      %c0_21 = arith.constant 0 : index
      %52 = vector.load %arg5[%c0_20, %c0_21] : memref<8x128xf32, #tpu.memory_space<vmem>>, vector<8x128xf32>
      %53 = vector.shape_cast %46 : vector<16x128xf32> to vector<2x8x128xf32>
      %cst_22 = arith.constant dense<0.000000e+00> : vector<8x128xf32>
      %54 = vector.multi_reduction <add>, %53, %cst_22 [0] : vector<2x8x128xf32> to vector<8x128xf32>
      %55 = arith.addf %52, %54 : vector<8x128xf32>
      %c0_23 = arith.constant 0 : index
      %c0_24 = arith.constant 0 : index
      %56 = vector.load %arg5[%c0_23, %c0_24] : memref<8x128xf32, #tpu.memory_space<vmem>>, vector<8x128xf32>
      tpu.vector_store %arg5[%c0_23, %c0_24], %55 {strides = array<i32>} : memref<8x128xf32, #tpu.memory_space<vmem>>, vector<8x128xf32>,
    } else {
    }
    return
  }
  func.func @transform_0(%arg0: i32, %arg1: i32) -> (i32, i32) {
    %c1_i32 = arith.constant 1 : i32
    %0 = arith.muli %arg0, %c1_i32 : i32
    %1 = arith.addi %0, %arg1 : i32
    %c0_i32 = arith.constant 0 : i32
    %2 = arith.minsi %1, %c0_i32 : i32
    %c0_i32_0 = arith.constant 0 : i32
    %c0_i32_1 = arith.constant 0 : i32
    return %2, %c0_i32_0 : i32, i32
  }
  func.func @transform_1(%arg0: i32, %arg1: i32) -> (i32, i32) {
    %c1_i32 = arith.constant 1 : i32
    %0 = arith.muli %arg0, %c1_i32 : i32
    %1 = arith.addi %0, %arg1 : i32
    %c0_i32 = arith.constant 0 : i32
    %2 = arith.minsi %1, %c0_i32 : i32
    %c0_i32_0 = arith.constant 0 : i32
    %c0_i32_1 = arith.constant 0 : i32
    return %2, %c0_i32_0 : i32, i32
  }
  func.func @transform_2(%arg0: i32, %arg1: i32) -> (i32, i32) {
    %c0_i32 = arith.constant 0 : i32
    %c0_i32_0 = arith.constant 0 : i32
    return %arg0, %c0_i32 : i32, i32
  }
  func.func @transform_3(%arg0: i32, %arg1: i32) -> (i32, i32) {
    %c0_i32 = arith.constant 0 : i32
    %c0_i32_0 = arith.constant 0 : i32
    return %arg0, %c0_i32 : i32, i32
  }
}

</mosaic_0001>

<llo_original>
// kernel: tpu_custom_call.1
$region0: #{tpu_custom_call.1}
  #allocation0 [shape = 'u32[]', space=smem, size = 0x4, offset = 0x4, fixed_abs, tag = 'smem constant byte address 0x4 - core index']
  #allocation1 [shape = 'u32[144,128]{1,0:T(1,128)}', space=vmem, size = 0x12000, scoped, tag = 'internal scratch']
  %s0 = inlined_call_operand.hbm [shape: f32[16,128], index: 0, kind: input, shape index: {}]
  %s1 = inlined_call_operand.hbm [shape: f32[16,128], index: 1, kind: input, shape index: {}]
  %s2 = inlined_call_operand.hbm [shape: f32[16,128], index: 2, kind: output, shape index: {0}]
  %s3 = inlined_call_operand.hbm [shape: f32[16,128], index: 3, kind: output, shape index: {1}]
  %4 = xla_tuple %s2, %s3
  %s5 = sld [smem:[#allocation0]]
  $region69: #{tpu_custom_call.1} parent=0
    _
  %s7 = ssub.s32 1, %s5
  %s8 = scalar_select 0, %s7, %s5
  $region1: #{tpu_custom_call.1} parent=0
    #allocation2 [shape = 'u8[16384]{0}', space=vmem, size = 0x4000, scoped, tag = 'input window, operand 0']
    #allocation3 [shape = 's32[2]{0}', space=sflag, size = 0x8, scoped, tag = 'scoped memory for tpu_custom_call.1']
    #allocation4 [shape = 's32[2]{0}', space=sflag, size = 0x8, scoped, tag = 'scoped memory for tpu_custom_call.1']
    #allocation5 [shape = 'u8[16384]{0}', space=vmem, size = 0x4000, scoped, tag = 'input window, operand 1']
    #allocation6 [shape = 's32[2]{0}', space=sflag, size = 0x8, scoped, tag = 'scoped memory for tpu_custom_call.1']
    #allocation7 [shape = 'u8[8192]{0}', space=vmem, size = 0x2000, scoped, tag = 'output window, operand 0']
    #allocation8 [shape = 'u8[8192]{0}', space=vmem, size = 0x2000, scoped, tag = 'output window, operand 1']
    #allocation9 [shape = 's32[2]{0}', space=sflag, size = 0x8, scoped, tag = 'scoped memory for tpu_custom_call.1']
    %9 = vsyncpa [#allocation3], 0
    %s10 = scalar_lea.sflag [#allocation3], 1
    %11 = vsyncpa %s10, 0
    %12 = vsyncpa [#allocation6], 0
    %s13 = scalar_lea.sflag [#allocation6], 1
    %14 = vsyncpa %s13, 0
    %15 = vsyncpa [#allocation4], 0
    %s16 = scalar_lea.sflag [#allocation4], 1
    %17 = vsyncpa %s16, 0
    %18 = vsyncpa [#allocation9], 0
    %s19 = scalar_lea.sflag [#allocation9], 1
    %20 = vsyncpa %s19, 0
    loop: start=0, step=1, limit=4
    $region2: #{tpu_custom_call.1} parent=1 // loop_pre_header
      _
    $region3: #{tpu_custom_call.1} parent=1 // loop_header
      %s22 = sphi 0, %s26
      %p23 = scmp.ge.s32.totalorder %s22, 4
      %s29 = sphi 0, %s41
      %s30 = sphi 0, %s37
      %s31 = sphi 0, %s29
      %s32 = sphi 0, %s30
      %s33 = sphi 0, %s31
      %s34 = sphi 0, %s32
      %s50 = sphi 0, %s52
      %s53 = sphi 0, %s50
      %s54 = sphi 0, %s53
      %s70 = sphi 0, %s54
      %s82 = sphi 0, %s84
      %s85 = sphi 0, %s82
      %s86 = sphi 0, %s85
      %s102 = sphi 0, %s86
      %s108 = sphi 0, %s110
      %s111 = sphi 0, %s108
      %s112 = sphi 0, %s111
      %s128 = sphi 0, %s112
      %s134 = sphi 0, %s136
      %s137 = sphi 0, %s134
      %s138 = sphi 0, %s137
      %s154 = sphi 0, %s138
    $region4: #{tpu_custom_call.1} parent=1 // loop_header_branch
      %25 = sbr.rel (%p23) target = $region8
    $region5: #{tpu_custom_call.1} parent=1 // loop_body
      %s27 = ssub.s32 %s22, 1
      %s28 = ssub.s32 %s22, 2
      %s35 = sadd.s32 1, %s30
      %p36 = scmp.ge.s32.totalorder %s35, 1
      %s37 = scalar_select %p36, 0, %s35
      %s38 = sadd.s32 1, %s29
      %s39 = scalar_select %p36, %s38, %s29
      %p40 = scmp.ge.s32.totalorder %s39, 2
      %s41 = scalar_select %p40, 0, %s39
      %s42 = sadd.s32 %s29, %s30
      %p43 = scmp.lt.s32.totalorder %s42, 0
      %s44 = scalar_select %p43, %s42, 0
      %s45 = sadd.s32 %s41, %s37
      %p46 = scmp.lt.s32.totalorder %s45, 0
      %s47 = scalar_select %p46, %s45, 0
      %s48 = ssub.s32 %s44, %s47
      %p49 = scmp.eq.s32.totalorder %s48, 0
      %s51 = sadd.s32 %s50, 1
      %s52 = scalar_select %p49, %s50, %s51
      %p55 = pneg %p49
      %p56 = scmp.eq.s32.totalorder %s22, 1
      %p57 = por %p55, %p56
      %p58 = scmp.ne.s32.totalorder %s50, %s53
      %p59 = scmp.eq.s32.totalorder %s22, 0
      %p60 = por %p58, %p59
      %p61 = scmp.ne.s32.totalorder %s50, %s53
      %p62 = scmp.eq.s32.totalorder %s27, 1
      %p63 = por %p61, %p62
      %p64 = scmp.ne.s32.totalorder %s53, %s54
      %p65 = scmp.eq.s32.totalorder %s27, 0
      %p66 = por %p64, %p65
      %p67 = scmp.ne.s32.totalorder %s53, %s54
      %p68 = scmp.eq.s32.totalorder %s28, 1
      %p69 = por %p67, %p68
      %p71 = scmp.ne.s32.totalorder %s54, %s70
      %p72 = scmp.eq.s32.totalorder %s28, 0
      %p73 = por %p71, %p72
      %s74 = sadd.s32 %s29, %s30
      %p75 = scmp.lt.s32.totalorder %s74, 0
      %s76 = scalar_select %p75, %s74, 0
      %s77 = sadd.s32 %s41, %s37
      %p78 = scmp.lt.s32.totalorder %s77, 0
      %s79 = scalar_select %p78, %s77, 0
      %s80 = ssub.s32 %s76, %s79
      %p81 = scmp.eq.s32.totalorder %s80, 0
      %s83 = sadd.s32 %s82, 1
      %s84 = scalar_select %p81, %s82, %s83
      %p87 = pneg %p81
      %p88 = scmp.eq.s32.totalorder %s22, 1
      %p89 = por %p87, %p88
      %p90 = scmp.ne.s32.totalorder %s82, %s85
      %p91 = scmp.eq.s32.totalorder %s22, 0
      %p92 = por %p90, %p91
      %p93 = scmp.ne.s32.totalorder %s82, %s85
      %p94 = scmp.eq.s32.totalorder %s27, 1
      %p95 = por %p93, %p94
      %p96 = scmp.ne.s32.totalorder %s85, %s86
      %p97 = scmp.eq.s32.totalorder %s27, 0
      %p98 = por %p96, %p97
      %p99 = scmp.ne.s32.totalorder %s85, %s86
      %p100 = scmp.eq.s32.totalorder %s28, 1
      %p101 = por %p99, %p100
      %p103 = scmp.ne.s32.totalorder %s86, %s102
      %p104 = scmp.eq.s32.totalorder %s28, 0
      %p105 = por %p103, %p104
      %s106 = ssub.s32 %s29, %s41
      %p107 = scmp.eq.s32.totalorder %s106, 0
      %s109 = sadd.s32 %s108, 1
      %s110 = scalar_select %p107, %s108, %s109
      %p113 = pneg %p107
      %p114 = scmp.eq.s32.totalorder %s22, 1
      %p115 = por %p113, %p114
      %p116 = scmp.ne.s32.totalorder %s108, %s111
      %p117 = scmp.eq.s32.totalorder %s22, 0
      %p118 = por %p116, %p117
      %p119 = scmp.ne.s32.totalorder %s108, %s111
      %p120 = scmp.eq.s32.totalorder %s27, 1
      %p121 = por %p119, %p120
      %p122 = scmp.ne.s32.totalorder %s111, %s112
      %p123 = scmp.eq.s32.totalorder %s27, 0
      %p124 = por %p122, %p123
      %p125 = scmp.ne.s32.totalorder %s111, %s112
      %p126 = scmp.eq.s32.totalorder %s28, 1
      %p127 = por %p125, %p126
      %p129 = scmp.ne.s32.totalorder %s112, %s128
      %p130 = scmp.eq.s32.totalorder %s28, 0
      %p131 = por %p129, %p130
      %s132 = ssub.s32 %s29, %s41
      %p133 = scmp.eq.s32.totalorder %s132, 0
      %s135 = sadd.s32 %s134, 1
      %s136 = scalar_select %p133, %s134, %s135
      %p139 = pneg %p133
      %p140 = scmp.eq.s32.totalorder %s22, 1
      %p141 = por %p139, %p140
      %p142 = scmp.ne.s32.totalorder %s134, %s137
      %p143 = scmp.eq.s32.totalorder %s22, 0
      %p144 = por %p142, %p143
      %p145 = scmp.ne.s32.totalorder %s134, %s137
      %p146 = scmp.eq.s32.totalorder %s27, 1
      %p147 = por %p145, %p146
      %p148 = scmp.ne.s32.totalorder %s137, %s138
      %p149 = scmp.eq.s32.totalorder %s27, 0
      %p150 = por %p148, %p149
      %p151 = scmp.ne.s32.totalorder %s137, %s138
      %p152 = scmp.eq.s32.totalorder %s28, 1
      %p153 = por %p151, %p152
      %p155 = scmp.ne.s32.totalorder %s138, %s154
      %p156 = scmp.eq.s32.totalorder %s28, 0
      %p157 = por %p155, %p156
      %p158 = scmp.le.s32.totalorder 1, %s22
      %p159 = scmp.lt.s32.totalorder %s22, 3
      %p160 = pnand %p158, %p159
      %p161 = pneg %p160
      // Predicated region
      $region9: #{tpu_custom_call.1} parent=5 // pred_check
        _
      $region10: #{tpu_custom_call.1} parent=5 // pred_check_branch
        %163 = sbr.rel (%p160) target = $region12
      $region11: #{tpu_custom_call.1} parent=5 // pred_region
        %s164 = ssub.s32 %s22, 1
      $region12: #{tpu_custom_call.1} parent=5 // pred_fallthru
        _
      %p165 = scmp.lt.s32.totalorder %s22, 2
      // Predicated region
      $region13: #{tpu_custom_call.1} parent=5 // pred_check
        %p166 = pneg %p165
      $region14: #{tpu_custom_call.1} parent=5 // pred_check_branch
        %168 = sbr.rel (%p166) target = $region16
      $region15: #{tpu_custom_call.1} parent=5 // pred_region
        // Predicated region
        $region17: #{tpu_custom_call.1} parent=15 // pred_check
          %p169 = pneg %p60
        $region18: #{tpu_custom_call.1} parent=15 // pred_check_branch
          %171 = sbr.rel (%p169) target = $region20
        $region19: #{tpu_custom_call.1} parent=15 // pred_region
          %s172 = sand.u32 %s50, 1
          %s173 = scalar_lea.sflag [#allocation3], %s172
          %s174 = sand.u32 %s50, 1
          %s175 = smul.addr %s174, 16
          %s176 = scalar_lea.vmem [#allocation2], %s175
          %s177 = sadd.s32 %s29, %s30
          %p178 = scmp.lt.s32.totalorder %s177, 0
          %s179 = scalar_select %p178, %s177, 0
          %s180 = smul.u32 2, %s179
          %s182 = ssub.s32 256, 256
          %183 = vsyncadd %s173, %s182
          %s184 = smul.addr %s180, 128
          %s185 = scalar_lea.hbm %s0, %s184
          %s186 = sshll.u32 %s176, 4
          %s187 = int_to_ptr.vmem [resolvable:$true] %s186
          %192 = dma.hbm_to_vmem [thread:$0]  %s185, 256, %s187, %s173, 128, 128, 8
        $region20: #{tpu_custom_call.1} parent=15 // pred_fallthru
          _
        // Predicated region
        $region21: #{tpu_custom_call.1} parent=15 // pred_check
          %p193 = pneg %p92
        $region22: #{tpu_custom_call.1} parent=15 // pred_check_branch
          %195 = sbr.rel (%p193) target = $region24
        $region23: #{tpu_custom_call.1} parent=15 // pred_region
          %s196 = sand.u32 %s82, 1
          %s197 = scalar_lea.sflag [#allocation6], %s196
          %s198 = sand.u32 %s82, 1
          %s199 = smul.addr %s198, 16
          %s200 = scalar_lea.vmem [#allocation5], %s199
          %s201 = sadd.s32 %s29, %s30
          %p202 = scmp.lt.s32.totalorder %s201, 0
          %s203 = scalar_select %p202, %s201, 0
          %s204 = smul.u32 2, %s203
          %s206 = ssub.s32 256, 256
          %207 = vsyncadd %s197, %s206
          %s208 = smul.addr %s204, 128
          %s209 = scalar_lea.hbm %s1, %s208
          %s210 = sshll.u32 %s200, 4
          %s211 = int_to_ptr.vmem [resolvable:$true] %s210
          %216 = dma.hbm_to_vmem [thread:$0]  %s209, 256, %s211, %s197, 128, 128, 8
        $region24: #{tpu_custom_call.1} parent=15 // pred_fallthru
          _
      $region16: #{tpu_custom_call.1} parent=5 // pred_fallthru
        _
      %p217 = scmp.le.s32.totalorder 1, %s22
      %p218 = scmp.lt.s32.totalorder %s22, 3
      %p219 = pnand %p217, %p218
      %p220 = pneg %p219
      // Predicated region
      $region25: #{tpu_custom_call.1} parent=5 // pred_check
        _
      $region26: #{tpu_custom_call.1} parent=5 // pred_check_branch
        %222 = sbr.rel (%p219) target = $region28
      $region27: #{tpu_custom_call.1} parent=5 // pred_region
        %s223 = ssub.s32 %s22, 1
        %s224 = sand.u32 %s53, 1
        %s225 = scalar_lea.sflag [#allocation3], %s224
        %s226 = sand.u32 %s53, 1
        %s227 = smul.addr %s226, 16
        %s228 = scalar_lea.vmem [#allocation2], %s227
        // Predicated region
        $region29: #{tpu_custom_call.1} parent=27 // pred_check
          %p229 = pneg %p66
        $region30: #{tpu_custom_call.1} parent=27 // pred_check_branch
          %231 = sbr.rel (%p229) target = $region32
        $region31: #{tpu_custom_call.1} parent=27 // pred_region
          %232 = dma.done %s225, 256
        $region32: #{tpu_custom_call.1} parent=27 // pred_fallthru
          _
        %s233 = sand.u32 %s85, 1
        %s234 = scalar_lea.sflag [#allocation6], %s233
        %s235 = sand.u32 %s85, 1
        %s236 = smul.addr %s235, 16
        %s237 = scalar_lea.vmem [#allocation5], %s236
        // Predicated region
        $region33: #{tpu_custom_call.1} parent=27 // pred_check
          %p238 = pneg %p98
        $region34: #{tpu_custom_call.1} parent=27 // pred_check_branch
          %240 = sbr.rel (%p238) target = $region36
        $region35: #{tpu_custom_call.1} parent=27 // pred_region
          %241 = dma.done %s234, 256
        $region36: #{tpu_custom_call.1} parent=27 // pred_fallthru
          _
        %s242 = sand.u32 %s53, 1
        %s243 = scalar_lea.sflag [#allocation3], %s242
        %s244 = sand.u32 %s53, 1
        %s245 = smul.addr %s244, 16
        %s246 = scalar_lea.vmem [#allocation2], %s245
        %p247 = pneg %p66
        %p248 = pneg %p63
        %s249 = sand.u32 %s85, 1
        %s250 = scalar_lea.sflag [#allocation6], %s249
        %s251 = sand.u32 %s85, 1
        %s252 = smul.addr %s251, 16
        %s253 = scalar_lea.vmem [#allocation5], %s252
        %p254 = pneg %p98
        %p255 = pneg %p95
        %p256 = pneg %p124
        %p257 = pneg %p121
        %s258 = sand.u32 %s111, 1
        %s259 = scalar_lea.sflag [#allocation4], %s258
        %s260 = sand.u32 %s111, 1
        %s261 = smul.addr %s260, 8
        %s262 = scalar_lea.vmem [#allocation7], %s261
        %p263 = pneg %p150
        %p264 = pneg %p147
        %s265 = sand.u32 %s137, 1
        %s266 = scalar_lea.sflag [#allocation9], %s265
        %s267 = sand.u32 %s137, 1
        %s268 = smul.addr %s267, 8
        %s269 = scalar_lea.vmem [#allocation8], %s268
        %s270 = sadd.s32 %s31, %s32
        %p271 = scmp.lt.s32.totalorder %s270, 0
        %s272 = scalar_select %p271, %s270, 0
        %s273 = smul.u32 2, %s272
        %s274 = sadd.s32 %s31, %s32
        %p275 = scmp.lt.s32.totalorder %s274, 0
        %s276 = scalar_select %p275, %s274, 0
        %s277 = smul.u32 2, %s276
        %p278 = scmp.eq.s32.totalorder %s32, 0
        // Predicated region
        $region37: #{tpu_custom_call.1} parent=27 // pred_check
          %p279 = pneg %p278
        $region38: #{tpu_custom_call.1} parent=27 // pred_check_branch
          %281 = sbr.rel (%p279) target = $region40
        $region39: #{tpu_custom_call.1} parent=27 // pred_region
          %282 = vst [vmem:[%s262] sm:$0xff] 0.0
          %283 = vst [vmem:[%s269] sm:$0xff] 0.0
        $region40: #{tpu_custom_call.1} parent=27 // pred_fallthru
          _
        %v284 = vld [vmem:[%s228] sm:$0xff]
        %v285 = vld [vmem:[%s228 + $0x8] sm:$0xff]
        %v286 = vld [vmem:[%s237] sm:$0xff]
        %v287 = vld [vmem:[%s237 + $0x8] sm:$0xff]
        %v288 = vand.u32 2147483647, %v284
        %v289 = vand.u32 2147483647, %v285
        %v290 = vsub.f32 0.0, %v288
        %v291 = vsub.f32 0.0, %v289
        %v292 = vmul.f32 %v290, 1.442695
        %v293 = vpow.pop %v292
        %v294 = vmul.f32 %v291, 1.442695
        %v295 = vpow.pop %v294
        %v296 = vadd.f32 %v293, 1.0
        %v297 = vlog2.pop %v296
        %v298 = vmul.f32 %v297, 0.6931472
        %v299 = vmul.f32 -0.5, %v293
        %v300 = vadd.f32 %v299, 1.0
        %v301 = vmul.f32 %v300, %v293
        %v302 = vand.u32 2147483647, %v293
        %vm303 = vcmp.lt.f32.partialorder %v302, 0.0004427343
        %v304 = vsel %vm303, %v301, %v298
        %v305 = vadd.f32 %v295, 1.0
        %v306 = vlog2.pop %v305
        %v307 = vmul.f32 %v306, 0.6931472
        %v308 = vmul.f32 -0.5, %v295
        %v309 = vadd.f32 %v308, 1.0
        %v310 = vmul.f32 %v309, %v295
        %v311 = vand.u32 2147483647, %v295
        %vm312 = vcmp.lt.f32.partialorder %v311, 0.0004427343
        %v313 = vsel %vm312, %v310, %v307
        %v314 = vmax.f32 %v284, 0.0
        %v315 = vmax.f32 %v285, 0.0
        %v316 = vmul.f32 %v284, %v286
        %v317 = vmul.f32 %v285, %v287
        %v318 = vsub.f32 %v314, %v316
        %v319 = vsub.f32 %v315, %v317
        %v320 = vadd.f32 %v318, %v304
        %v321 = vadd.f32 %v319, %v313
        %v322 = vsub.f32 0.0, %v284
        %v323 = vsub.f32 0.0, %v285
        %v324 = vmax.f32 %v322, 0.0
        %v325 = vmax.f32 %v323, 0.0
        %v326 = vadd.f32 %v316, %v324
        %v327 = vadd.f32 %v317, %v325
        %v328 = vadd.f32 %v326, %v304
        %v329 = vadd.f32 %v327, %v313
        %v330 = vmul.f32 %v328, -2.0
        %v331 = vmul.f32 %v329, -2.0
        %v332 = vmul.f32 %v330, 1.442695
        %v333 = vpow.pop %v332
        %v334 = vmul.f32 %v331, 1.442695
        %v335 = vpow.pop %v334
        %v336 = vmul.f32 %v333, %v320
        %v337 = vmul.f32 %v335, %v321
        %s338 = sadd.s32 %s31, %s32
        %p339 = scmp.lt.s32.totalorder %s338, 1
        // Predicated region
        $region41: #{tpu_custom_call.1} parent=27 // pred_check
          %p340 = pneg %p339
        $region42: #{tpu_custom_call.1} parent=27 // pred_check_branch
          %342 = sbr.rel (%p340) target = $region44
        $region43: #{tpu_custom_call.1} parent=27 // pred_region
          %v343 = vld [vmem:[%s262] sm:$0xff]
          %v344 = vadd.f32 %v336, %v337
          %v345 = vadd.f32 %v343, %v344
          %346 = vst [vmem:[%s262] sm:$0xff] %v345
          %v347 = vld [vmem:[%s269] sm:$0xff]
          %v348 = vadd.f32 %v286, %v287
          %v349 = vadd.f32 %v347, %v348
          %350 = vst [vmem:[%s269] sm:$0xff] %v349
        $region44: #{tpu_custom_call.1} parent=27 // pred_fallthru
          _
        %p351 = scmp.ge.s32.totalorder %s338, 1
        // Predicated region
        $region45: #{tpu_custom_call.1} parent=27 // pred_check
          %p352 = pneg %p351
        $region46: #{tpu_custom_call.1} parent=27 // pred_check_branch
          %354 = sbr.rel (%p352) target = $region48
        $region47: #{tpu_custom_call.1} parent=27 // pred_region
          %s355 = smul.u32 %s338, 2048
          %s356 = ssub.s32 2048, %s355
          %v357 = vlaneseq
          %v358 = vshrl.u32 %v357, 7
          %v359 = vadd.s32 %v358, 8
          %v360 = vlaneseq
          %v361 = vand.u32 %v360, 127
          %v362 = vmul.u32 %v358, 128
          %v363 = vmul.u32 %v359, 128
          %v364 = vadd.s32 %v362, %v361
          %v365 = vadd.s32 %v363, %v361
          %v366 = vstv %s356
          %vm367 = vcmp.lt.s32.totalorder %v364, %v366
          %vm368 = vcmp.lt.s32.totalorder %v365, %v366
          %v369 = vsel %vm367, %v336, 0.0
          %v370 = vsel %vm368, %v337, 0.0
          %v371 = vsel %vm367, %v286, 0.0
          %v372 = vsel %vm368, %v287, 0.0
          %v373 = vld [vmem:[%s262] sm:$0xff]
          %v374 = vadd.f32 %v369, %v370
          %v375 = vadd.f32 %v373, %v374
          %376 = vst [vmem:[%s262] sm:$0xff] %v375
          %v377 = vld [vmem:[%s269] sm:$0xff]
          %v378 = vadd.f32 %v371, %v372
          %v379 = vadd.f32 %v377, %v378
          %380 = vst [vmem:[%s269] sm:$0xff] %v379
        $region48: #{tpu_custom_call.1} parent=27 // pred_fallthru
          _
        %s381 = sand.u32 %s111, 1
        %s382 = scalar_lea.sflag [#allocation4], %s381
        %s383 = sand.u32 %s111, 1
        %s384 = smul.addr %s383, 8
        %s385 = scalar_lea.vmem [#allocation7], %s384
        %s386 = sand.u32 %s137, 1
        %s387 = scalar_lea.sflag [#allocation9], %s386
        %s388 = sand.u32 %s137, 1
        %s389 = smul.addr %s388, 8
        %s390 = scalar_lea.vmem [#allocation8], %s389
        // Predicated region
        $region49: #{tpu_custom_call.1} parent=27 // pred_check
          %p391 = pneg %p121
        $region50: #{tpu_custom_call.1} parent=27 // pred_check_branch
          %393 = sbr.rel (%p391) target = $region52
        $region51: #{tpu_custom_call.1} parent=27 // pred_region
          %s395 = ssub.s32 128, 128
          %396 = vsyncadd %s382, %s395
          %s397 = smul.addr %s31, 128
          %s398 = scalar_lea.hbm %s2, %s397
          %s400 = sshll.u32 %s385, 4
          %s401 = int_to_ptr.vmem [resolvable:$true] %s400
          %403 = dma.vmem_to_hbm [thread:$0]  %s401, 128, %s398, %s382
        $region52: #{tpu_custom_call.1} parent=27 // pred_fallthru
          _
        // Predicated region
        $region53: #{tpu_custom_call.1} parent=27 // pred_check
          %p404 = pneg %p147
        $region54: #{tpu_custom_call.1} parent=27 // pred_check_branch
          %406 = sbr.rel (%p404) target = $region56
        $region55: #{tpu_custom_call.1} parent=27 // pred_region
          %s408 = ssub.s32 128, 128
          %409 = vsyncadd %s387, %s408
          %s410 = smul.addr %s31, 128
          %s411 = scalar_lea.hbm %s3, %s410
          %s413 = sshll.u32 %s390, 4
          %s414 = int_to_ptr.vmem [resolvable:$true] %s413
          %416 = dma.vmem_to_hbm [thread:$0]  %s414, 128, %s411, %s387
        $region56: #{tpu_custom_call.1} parent=27 // pred_fallthru
          _
      $region28: #{tpu_custom_call.1} parent=5 // pred_fallthru
        _
      %p417 = scmp.le.s32.totalorder 2, %s22
      // Predicated region
      $region57: #{tpu_custom_call.1} parent=5 // pred_check
        %p418 = pneg %p417
      $region58: #{tpu_custom_call.1} parent=5 // pred_check_branch
        %420 = sbr.rel (%p418) target = $region60
      $region59: #{tpu_custom_call.1} parent=5 // pred_region
        %s421 = ssub.s32 %s22, 2
        // Predicated region
        $region61: #{tpu_custom_call.1} parent=59 // pred_check
          %p422 = pneg %p127
        $region62: #{tpu_custom_call.1} parent=59 // pred_check_branch
          %424 = sbr.rel (%p422) target = $region64
        $region63: #{tpu_custom_call.1} parent=59 // pred_region
          %s425 = sand.u32 %s112, 1
          %s426 = scalar_lea.sflag [#allocation4], %s425
          %s427 = sand.u32 %s112, 1
          %s428 = smul.addr %s427, 8
          %s429 = scalar_lea.vmem [#allocation7], %s428
          %430 = dma.done %s426, 128
        $region64: #{tpu_custom_call.1} parent=59 // pred_fallthru
          _
        // Predicated region
        $region65: #{tpu_custom_call.1} parent=59 // pred_check
          %p431 = pneg %p153
        $region66: #{tpu_custom_call.1} parent=59 // pred_check_branch
          %433 = sbr.rel (%p431) target = $region68
        $region67: #{tpu_custom_call.1} parent=59 // pred_region
          %s434 = sand.u32 %s138, 1
          %s435 = scalar_lea.sflag [#allocation9], %s434
          %s436 = sand.u32 %s138, 1
          %s437 = smul.addr %s436, 8
          %s438 = scalar_lea.vmem [#allocation8], %s437
          %439 = dma.done %s435, 128
        $region68: #{tpu_custom_call.1} parent=59 // pred_fallthru
          _
      $region60: #{tpu_custom_call.1} parent=5 // pred_fallthru
        _
    $region6: #{tpu_custom_call.1} parent=1 // loop_footer
      %s26 = sadd.s32 1, %s22
    $region7: #{tpu_custom_call.1} parent=1 // loop_footer_branch
      %21 = sbr.rel target = $region3
    $region8: #{tpu_custom_call.1} parent=1 // loop_exit
      _
    %440 = vsyncpa [#allocation3], 1
    %s441 = scalar_lea.sflag [#allocation3], 1
    %442 = vsyncpa %s441, 1
    %443 = vsyncpa [#allocation6], 1
    %s444 = scalar_lea.sflag [#allocation6], 1
    %445 = vsyncpa %s444, 1
    %446 = vsyncpa [#allocation4], 1
    %s447 = scalar_lea.sflag [#allocation4], 1
    %448 = vsyncpa %s447, 1
    %449 = vsyncpa [#allocation9], 1
    %s450 = scalar_lea.sflag [#allocation9], 1
    %451 = vsyncpa %s450, 1

</llo_original>
